<compile_context>
chip_gen: v5e
topology: v5e:2x2
jax: 0.10.0
libtpu: 0.0.40
codegen_flags: <defaults>
</compile_context>

<pallas_src>
import functools

import jax
import jax.numpy as jnp
from jax.experimental import pallas as pl
from jax.experimental.pallas import tpu as pltpu


# ----------------------------------------------------------------------------
# Kernel 1: QKV projection, one (batch, seq-block, head) tile per grid step.
# ----------------------------------------------------------------------------
def qkv_head_proj_kernel(x_ref, w_ref, q_ref, k_ref, v_ref, *, w_resident):
    # x_ref: (1, tq, D)
    # w_ref: (H, D, 3*hd) VMEM-resident (constant index_map)  OR  (1, D, 3*hd) streamed
    # q/k/v_ref: (1, 1, tq, hd)
    hd = q_ref.shape[-1]
    x = x_ref[0]                                            # (tq, D)
    w = w_ref[pl.program_id(2)] if w_resident else w_ref[0]  # (D, 3*hd); Q cols pre-scaled
    # One wide (tq, D) @ (D, 3*hd) matmul keeps the MXU fuller than three hd-wide dots;
    # the column slicing below is a one-off per-tile relayout.
    # TODO(synk): for hd < 128 on v6e/v7x, group 2-4 heads per grid step so the matmul
    # N-dim and the stored last dim reach >= 128 (lane-dense stores, fuller MXU).
    y = jnp.dot(x, w, preferred_element_type=jnp.float32)    # (tq, 3*hd) f32 accum
    q_ref[0, 0] = y[:, :hd].astype(q_ref.dtype)
    k_ref[0, 0] = y[:, hd:2 * hd].astype(k_ref.dtype)
    v_ref[0, 0] = y[:, 2 * hd:3 * hd].astype(v_ref.dtype)


# ----------------------------------------------------------------------------
# Kernel 2: flash attention (online softmax) + fused per-head output projection.
# grid = (B, n_q_blocks, H, n_kv_blocks); H and kv are reduction ("arbitrary") axes.
# ----------------------------------------------------------------------------
def flash_mha_kernel(q_ref, k_ref, v_ref, wp_ref, b_ref, o_ref,
                     m_s, l_s, acc_s, out_s, *, exp_dtype, wp_resident):
    h = pl.program_id(2)
    kj = pl.program_id(3)
    nh = pl.num_programs(2)
    nkv = pl.num_programs(3)

    # Start of the head reduction for this (batch, q-block): seed the lane-dense (tq, D)
    # output accumulator with the projection bias (saves a VPU add in the final step).
    @pl.when((h == 0) & (kj == 0))
    def _():
        out_s[...] = jnp.broadcast_to(b_ref[...].astype(jnp.float32), out_s.shape)

    # Reset online-softmax state at the start of each head's kv loop.
    @pl.when(kj == 0)
    def _():
        m_s[...] = jnp.full(m_s.shape, -jnp.inf, m_s.dtype)
        l_s[...] = jnp.zeros_like(l_s)
        acc_s[...] = jnp.zeros_like(acc_s)

    q = q_ref[0, 0]                           # (tq, hd), already scaled by head_dim**-0.5
    k = k_ref[0, 0]                           # (tk, hd)
    v = v_ref[0, 0]                           # (tk, hd)

    # Scores: contract on the hd axis of both operands (no in-kernel transpose).
    s = jax.lax.dot_general(q, k, (((1,), (1,)), ((), ())),
                            preferred_element_type=jnp.float32)   # (tq, tk) f32

    m_prev = m_s[...]
    m_new = jnp.maximum(m_prev, jnp.max(s, axis=-1, keepdims=True))
    alpha = jnp.exp(m_prev - m_new)
    # exp in bf16 for bf16 inputs (v6e/v7x EUP bf16 is ~2x f32 rate); m/l stay f32.
    p = jnp.exp((s - m_new).astype(exp_dtype))
    l_s[...] = alpha * l_s[...] + jnp.sum(p.astype(jnp.float32), axis=-1, keepdims=True)
    acc_s[...] = alpha * acc_s[...] + jnp.dot(
        p.astype(v.dtype), v, preferred_element_type=jnp.float32)  # (tq, hd)
    m_s[...] = m_new

    # End of this head's kv loop: normalize and fuse the per-head output projection.
    @pl.when(kj == nkv - 1)
    def _():
        ctx = acc_s[...] * pl.reciprocal(l_s[...], approx=True)    # (tq, hd) f32
        wp = wp_ref[h] if wp_resident else wp_ref[0]               # (hd, D)
        out_s[...] += jnp.dot(ctx.astype(wp_ref.dtype), wp,
                              preferred_element_type=jnp.float32)  # (tq, D) lane-dense

    # Last head + last kv block: write the lane-dense output block (bias already folded).
    @pl.when((h == nh - 1) & (kj == nkv - 1))
    def _():
        o_ref[0] = out_s[...].astype(o_ref.dtype)


# ----------------------------------------------------------------------------
# Wrapper helpers
# ----------------------------------------------------------------------------
def _max_seq_tile():
    """Generation-aware max sequence tile (512 on v6e, 256 on v5e/v7x)."""
    try:
        kind = jax.devices()[0].device_kind.lower()
    except Exception:  # pragma: no cover - CPU/interpret fallbacks
        return 256
    if "v6" in kind or "trillium" in kind:
        return 512   # 128 MiB VMEM: bigger tiles amortize per-step overhead / refetches
    return 256       # v5e (small default scoped VMEM) / v7x (64 MiB physical VMEM)


def _seq_block(n, max_tile):
    """Largest 'nice' sequence tile dividing n (multiple of 8), else full n."""
    for cand in (512, 256, 128, 64, 32, 16, 8):
        if cand <= max_tile and n % cand == 0:
            return cand
    return n


def _vmem_limit(estimate_bytes):
    # Lift v5e's 16 MiB default scoped VMEM; stay at/below v7x's 64 MiB physical VMEM.
    return int(min(64 * 2 ** 20, max(32 * 2 ** 20, 2 * estimate_bytes)))


_RESIDENT_WEIGHT_BYTES = 16 * 2 ** 20   # keep VMEM-resident weights <= ~16 MiB (v7x-safe)


# ----------------------------------------------------------------------------
# Wrapper
# ----------------------------------------------------------------------------
def mha_pallas(x, w_qkv, w_proj, b_proj, num_heads, seq_tile=None):
    """x: (B, N, D); w_qkv: (3D, D) [torch Linear, bias=False]; w_proj: (D, D); b_proj: (D,)."""
    b, n, d = x.shape
    assert d % num_heads == 0, "embed_dim must be divisible by num_heads"
    hd = d // num_heads
    scale = hd ** (-0.5)

    # --- weight layout plumbing (trace-time, zero in-kernel cost) ---
    # Pre-transpose qkv weight to (D, 3D), fold the softmax scale into the Q columns,
    # then rearrange to a per-head layout (H, D, 3*hd) with columns [q | k | v].
    w_t = w_qkv.T                                              # (D, 3D)
    col_scale = jnp.concatenate([jnp.full((d,), scale, w_t.dtype),
                                 jnp.ones((2 * d,), w_t.dtype)])
    w_t = w_t * col_scale[None, :]
    w_heads = (w_t.reshape(d, 3, num_heads, hd)
                   .transpose(2, 0, 1, 3)
                   .reshape(num_heads, d, 3 * hd))             # (H, D, 3*hd)
    wp_heads = w_proj.T.reshape(num_heads, hd, d)              # (H, hd, D)
    bias = b_proj.reshape(1, d)

    if seq_tile is None:
        seq_tile = _max_seq_tile()
    tq = _seq_block(n, seq_tile)
    tk = tq
    nq = n // tq
    nk = n // tk

    xb = jnp.dtype(x.dtype).itemsize
    wb = jnp.dtype(w_heads.dtype).itemsize

    # Keep the full weights VMEM-resident (constant index_map -> single HBM fetch) only
    # when they comfortably fit; otherwise stream per-head tiles as before.
    w_resident = (3 * d * d * wb) <= _RESIDENT_WEIGHT_BYTES
    wp_resident = (d * d * wb) <= _RESIDENT_WEIGHT_BYTES

    # ---- Kernel 1: per-head QKV projection -> Q, K, V in (B, H, N, hd) layout ----
    if w_resident:
        w_spec = pl.BlockSpec((num_heads, d, 3 * hd), lambda bi, qi, h: (0, 0, 0))
    else:
        w_spec = pl.BlockSpec((1, d, 3 * hd), lambda bi, qi, h: (h, 0, 0))
    est1 = (2 * tq * d * xb                                   # x block (double-buffered)
            + 2 * 3 * d * d * wb                              # weight (+ spare buffer)
            + 2 * 3 * tq * hd * xb)                           # q/k/v output blocks
    cost1 = pl.CostEstimate(flops=int(2 * b * n * d * 3 * d),
                            transcendentals=0,
                            bytes_accessed=int(b * n * d * xb + 3 * d * d * wb
                                               + 3 * b * n * d * xb))
    q, k, v = pl.pallas_call(
        functools.partial(qkv_head_proj_kernel, w_resident=w_resident),
        grid=(b, nq, num_heads),
        in_specs=[
            pl.BlockSpec((1, tq, d), lambda bi, qi, h: (bi, qi, 0)),
            w_spec,
        ],
        out_specs=[
            pl.BlockSpec((1, 1, tq, hd), lambda bi, qi, h: (bi, h, qi, 0)),
            pl.BlockSpec((1, 1, tq, hd), lambda bi, qi, h: (bi, h, qi, 0)),
            pl.BlockSpec((1, 1, tq, hd), lambda bi, qi, h: (bi, h, qi, 0)),
        ],
        out_shape=[jax.ShapeDtypeStruct((b, num_heads, n, hd), x.dtype)] * 3,
        compiler_params=pltpu.CompilerParams(
            dimension_semantics=("parallel", "parallel", "parallel"),
            vmem_limit_bytes=_vmem_limit(est1)),
        cost_estimate=cost1,
    )(x, w_heads)

    # ---- Kernel 2: flash attention + fused output projection ----
    if wp_resident:
        wp_spec = pl.BlockSpec((num_heads, hd, d), lambda bi, qi, h, kj: (0, 0, 0))
    else:
        wp_spec = pl.BlockSpec((1, hd, d), lambda bi, qi, h, kj: (h, 0, 0))
    # exp in bf16 only when the data is already bf16 (safe everywhere; fast on v6e/v7x).
    exp_dtype = jnp.bfloat16 if x.dtype == jnp.bfloat16 else jnp.float32
    est2 = (2 * tq * hd * xb + 2 * 2 * tk * hd * xb           # Q + K/V blocks
            + 2 * d * d * wb + 2 * d * wb                     # W_proj + bias
            + 2 * tq * d * xb                                 # output block
            + (2 * tq + tq * hd + tq * d) * 4)                # f32 scratch
    cost2 = pl.CostEstimate(
        flops=int(4 * b * num_heads * n * n * hd + 2 * b * n * d * d),
        transcendentals=int(b * num_heads * n * n),
        bytes_accessed=int(4 * b * n * d * xb + d * d * wb + d * wb))
    # TODO(synk): consider pipeline_mode=pl.Buffered(3) on the K/V specs to hide the
    # latency of their small per-step DMAs.
    out = pl.pallas_call(
        functools.partial(flash_mha_kernel, exp_dtype=exp_dtype, wp_resident=wp_resident),
        grid=(b, nq, num_heads, nk),
        in_specs=[
            pl.BlockSpec((1, 1, tq, hd), lambda bi, qi, h, kj: (bi, h, qi, 0)),  # Q
            pl.BlockSpec((1, 1, tk, hd), lambda bi, qi, h, kj: (bi, h, kj, 0)),  # K
            pl.BlockSpec((1, 1, tk, hd), lambda bi, qi, h, kj: (bi, h, kj, 0)),  # V
            wp_spec,                                                             # W_proj
            pl.BlockSpec((1, d), lambda bi, qi, h, kj: (0, 0)),                  # bias
        ],
        out_specs=pl.BlockSpec((1, tq, d), lambda bi, qi, h, kj: (bi, qi, 0)),
        out_shape=jax.ShapeDtypeStruct((b, n, d), x.dtype),
        scratch_shapes=[
            pltpu.VMEM((tq, 1), jnp.float32),    # running max
            pltpu.VMEM((tq, 1), jnp.float32),    # running sum
            pltpu.VMEM((tq, hd), jnp.float32),   # per-head context accumulator
            pltpu.VMEM((tq, d), jnp.float32),    # lane-dense output accumulator
        ],
        compiler_params=pltpu.CompilerParams(
            dimension_semantics=("parallel", "parallel", "arbitrary", "arbitrary"),
            vmem_limit_bytes=_vmem_limit(est2)),
        cost_estimate=cost2,
    )(q, k, v, wp_heads, bias)
    return out


# ----------------------------------------------------------------------------
# Pure-JAX reference mirroring the PyTorch forward exactly.
# ----------------------------------------------------------------------------
def mha_reference(x, w_qkv, w_proj, b_proj, num_heads):
    b, n, d = x.shape
    hd = d // num_heads
    scale = hd ** (-0.5)
    qkv = x @ w_qkv.T                                    # (b, n, 3d)
    qkv = qkv.reshape(b, n, 3, num_heads, hd).transpose(2, 0, 3, 1, 4)
    q, k, v = qkv[0], qkv[1], qkv[2]                     # (b, h, n, hd)
    attn = jnp.einsum("bhqd,bhkd->bhqk", q, k) * scale
    attn = jax.nn.softmax(attn, axis=-1)
    out = jnp.einsum("bhqk,bhkd->bhqd", attn, v)
    out = out.transpose(0, 2, 1, 3).reshape(b, n, d)
    return out @ w_proj.T + b_proj


if __name__ == "__main__":
    # Small shapes consistent with the module (embed_dim divisible by num_heads).
    B, N, D = 2, 8, 32
    NUM_HEADS = 4

    key = jax.random.PRNGKey(0)
    k1, k2, k3, k4 = jax.random.split(key, 4)
    x = jax.random.normal(k1, (B, N, D), dtype=jnp.float32)
    w_qkv = jax.random.normal(k2, (3 * D, D), dtype=jnp.float32) * (D ** -0.5)   # qkv, bias=False
    w_proj = jax.random.normal(k3, (D, D), dtype=jnp.float32) * (D ** -0.5)      # proj weight
    b_proj = jax.random.normal(k4, (D,), dtype=jnp.float32) * 0.1                # proj bias

    out = jax.block_until_ready(mha_pallas(x, w_qkv, w_proj, b_proj, NUM_HEADS))
    ref = mha_reference(x, w_qkv, w_proj, b_proj, NUM_HEADS)
    assert out.shape == (B, N, D)
    assert jnp.allclose(out, ref, atol=2e-3, rtol=2e-3), "Pallas MHA mismatch vs reference"

    # Second (still small) config that exercises multi-block tiling along the sequence,
    # the online-softmax accumulation across kv blocks, and the head reduction.
    B2, N2, D2, H2 = 2, 128, 64, 4
    kk = jax.random.split(jax.random.PRNGKey(1), 4)
    x2 = jax.random.normal(kk[0], (B2, N2, D2), dtype=jnp.float32)
    wq2 = jax.random.normal(kk[1], (3 * D2, D2), dtype=jnp.float32) * (D2 ** -0.5)
    wp2 = jax.random.normal(kk[2], (D2, D2), dtype=jnp.float32) * (D2 ** -0.5)
    bp2 = jax.random.normal(kk[3], (D2,), dtype=jnp.float32) * 0.1
    out2 = jax.block_until_ready(mha_pallas(x2, wq2, wp2, bp2, H2, seq_tile=64))
    ref2 = mha_reference(x2, wq2, wp2, bp2, H2)
    assert jnp.allclose(out2, ref2, atol=2e-3, rtol=2e-3), "Pallas MHA mismatch (tiled case)"

    print("KERNEL_OK")
</pallas_src>

<mosaic_0001>
module attributes {stable_mosaic.version = 11 : i64} {
  func.func @qkv_head_proj_kernel(%arg0: i32, %arg1: i32, %arg2: i32, %arg3: memref<1x8x32xf32, #tpu.memory_space<vmem>>, %arg4: memref<4x32x24xf32, #tpu.memory_space<vmem>>, %arg5: memref<1x1x8x8xf32, #tpu.memory_space<vmem>>, %arg6: memref<1x1x8x8xf32, #tpu.memory_space<vmem>>, %arg7: memref<1x1x8x8xf32, #tpu.memory_space<vmem>>) attributes {dimension_semantics = [#tpu.dimension_semantics<parallel>, #tpu.dimension_semantics<parallel>, #tpu.dimension_semantics<parallel>], iteration_bounds = array<i64: 2, 1, 4>, scalar_prefetch = 0 : i64, scratch_operands = 0 : i64, tpu.core_type = #tpu.core_type<tc>, window_params = [{transform_indices = @transform_0, window_bounds = array<i64: 1, 8, 32>}, {pipeline_mode = #tpu.pipeline_mode<synchronous>, transform_indices = @transform_1, window_bounds = array<i64: 4, 32, 24>}, {transform_indices = @transform_2, window_bounds = array<i64: 1, 1, 8, 8>}, {transform_indices = @transform_3, window_bounds = array<i64: 1, 1, 8, 8>}, {transform_indices = @transform_4, window_bounds = array<i64: 1, 1, 8, 8>}]} {
    %c0 = arith.constant 0 : index
    %c0_0 = arith.constant 0 : index
    %c0_1 = arith.constant 0 : index
    %0 = vector.load %arg3[%c0, %c0_0, %c0_1] : memref<1x8x32xf32, #tpu.memory_space<vmem>>, vector<1x8x32xf32>
    %1 = vector.shape_cast %0 : vector<1x8x32xf32> to vector<8x32xf32>
    %2 = arith.index_cast %arg2 : i32 to index
    %c0_2 = arith.constant 0 : index
    %c0_3 = arith.constant 0 : index
    %3 = vector.load %arg4[%2, %c0_2, %c0_3] : memref<4x32x24xf32, #tpu.memory_space<vmem>>, vector<1x32x24xf32>
    %4 = vector.shape_cast %3 : vector<1x32x24xf32> to vector<32x24xf32>
    %cst = arith.constant dense<0.000000e+00> : vector<8x24xf32>
    %5 = tpu.matmul %1, %4, %cst {dimension_numbers = #tpu.dot_dimension_numbers<[1], [0], [0], [1], [0, 0, 1, 1], [], []>} : vector<8x32xf32>, vector<32x24xf32>, vector<8x24xf32> -> vector<8x24xf32>
    %6 = vector.extract_strided_slice %5 {offsets = [0, 0], sizes = [8, 8], strides = [1, 1]} : vector<8x24xf32> to vector<8x8xf32>
    %c0_4 = arith.constant 0 : index
    %c0_5 = arith.constant 0 : index
    %c0_6 = arith.constant 0 : index
    %c0_7 = arith.constant 0 : index
    %7 = vector.load %arg5[%c0_4, %c0_5, %c0_6, %c0_7] : memref<1x1x8x8xf32, #tpu.memory_space<vmem>>, vector<1x1x8x8xf32>
    %8 = vector.shape_cast %7 : vector<1x1x8x8xf32> to vector<8x8xf32>
    %9 = vector.shape_cast %6 : vector<8x8xf32> to vector<1x1x8x8xf32>
    tpu.vector_store %arg5[%c0_4, %c0_5, %c0_6, %c0_7], %9 {strides = array<i32>} : memref<1x1x8x8xf32, #tpu.memory_space<vmem>>, vector<1x1x8x8xf32>,
    %10 = vector.extract_strided_slice %5 {offsets = [0, 8], sizes = [8, 8], strides = [1, 1]} : vector<8x24xf32> to vector<8x8xf32>
    %c0_8 = arith.constant 0 : index
    %c0_9 = arith.constant 0 : index
    %c0_10 = arith.constant 0 : index
    %c0_11 = arith.constant 0 : index
    %11 = vector.load %arg6[%c0_8, %c0_9, %c0_10, %c0_11] : memref<1x1x8x8xf32, #tpu.memory_space<vmem>>, vector<1x1x8x8xf32>
    %12 = vector.shape_cast %11 : vector<1x1x8x8xf32> to vector<8x8xf32>
    %13 = vector.shape_cast %10 : vector<8x8xf32> to vector<1x1x8x8xf32>
    tpu.vector_store %arg6[%c0_8, %c0_9, %c0_10, %c0_11], %13 {strides = array<i32>} : memref<1x1x8x8xf32, #tpu.memory_space<vmem>>, vector<1x1x8x8xf32>,
    %14 = vector.extract_strided_slice %5 {offsets = [0, 16], sizes = [8, 8], strides = [1, 1]} : vector<8x24xf32> to vector<8x8xf32>
    %c0_12 = arith.constant 0 : index
    %c0_13 = arith.constant 0 : index
    %c0_14 = arith.constant 0 : index
    %c0_15 = arith.constant 0 : index
    %15 = vector.load %arg7[%c0_12, %c0_13, %c0_14, %c0_15] : memref<1x1x8x8xf32, #tpu.memory_space<vmem>>, vector<1x1x8x8xf32>
    %16 = vector.shape_cast %15 : vector<1x1x8x8xf32> to vector<8x8xf32>
    %17 = vector.shape_cast %14 : vector<8x8xf32> to vector<1x1x8x8xf32>
    tpu.vector_store %arg7[%c0_12, %c0_13, %c0_14, %c0_15], %17 {strides = array<i32>} : memref<1x1x8x8xf32, #tpu.memory_space<vmem>>, vector<1x1x8x8xf32>,
    return
  }
  func.func @transform_0(%arg0: i32, %arg1: i32, %arg2: i32) -> (i32, i32, i32) {
    %c0_i32 = arith.constant 0 : i32
    %c0_i32_0 = arith.constant 0 : i32
    return %arg0, %arg1, %c0_i32 : i32, i32, i32
  }
  func.func @transform_1(%arg0: i32, %arg1: i32, %arg2: i32) -> (i32, i32, i32) {
    %c0_i32 = arith.constant 0 : i32
    %c0_i32_0 = arith.constant 0 : i32
    %c0_i32_1 = arith.constant 0 : i32
    %c0_i32_2 = arith.constant 0 : i32
    return %c0_i32, %c0_i32_0, %c0_i32_1 : i32, i32, i32
  }
  func.func @transform_2(%arg0: i32, %arg1: i32, %arg2: i32) -> (i32, i32, i32, i32) {
    %c0_i32 = arith.constant 0 : i32
    %c0_i32_0 = arith.constant 0 : i32
    return %arg0, %arg2, %arg1, %c0_i32 : i32, i32, i32, i32
  }
  func.func @transform_3(%arg0: i32, %arg1: i32, %arg2: i32) -> (i32, i32, i32, i32) {
    %c0_i32 = arith.constant 0 : i32
    %c0_i32_0 = arith.constant 0 : i32
    return %arg0, %arg2, %arg1, %c0_i32 : i32, i32, i32, i32
  }
  func.func @transform_4(%arg0: i32, %arg1: i32, %arg2: i32) -> (i32, i32, i32, i32) {
    %c0_i32 = arith.constant 0 : i32
    %c0_i32_0 = arith.constant 0 : i32
    return %arg0, %arg2, %arg1, %c0_i32 : i32, i32, i32, i32
  }
}

</mosaic_0001>

<llo_original>
// kernel: tpu_custom_call.1
$region0: #{tpu_custom_call.1}
  #allocation0 [shape = 'u32[]', space=smem, size = 0x4, offset = 0x4, fixed_abs, tag = 'smem constant byte address 0x4 - core index']
  #allocation1 [shape = 'u32[72,128]{1,0:T(1,128)}', space=vmem, size = 0x9000, scoped, tag = 'internal scratch']
  %s0 = inlined_call_operand.vmem [shape: f32[2,8,32], index: 0, kind: input, shape index: {}]
  %s1 = inlined_call_operand.vmem [shape: f32[4,32,24], index: 1, kind: input, shape index: {}]
  %s2 = inlined_call_operand.hbm [shape: f32[2,4,8,8], index: 2, kind: output, shape index: {0}]
  %s3 = inlined_call_operand.hbm [shape: f32[2,4,8,8], index: 3, kind: output, shape index: {1}]
  %s4 = inlined_call_operand.hbm [shape: f32[2,4,8,8], index: 4, kind: output, shape index: {2}]
  %5 = xla_tuple %s2, %s3, %s4
  %s6 = sld [smem:[#allocation0]]
  $region57: #{tpu_custom_call.1} parent=0
    _
  %s8 = ssub.s32 1, %s6
  %s9 = scalar_select 0, %s8, %s6
  $region1: #{tpu_custom_call.1} parent=0
    #allocation2 [shape = 'u8[8192]{0}', space=vmem, size = 0x2000, scoped, tag = 'output window, operand 0']
    #allocation3 [shape = 's32[2]{0}', space=sflag, size = 0x8, scoped, tag = 'scoped memory for tpu_custom_call.1']
    #allocation4 [shape = 'u8[8192]{0}', space=vmem, size = 0x2000, scoped, tag = 'output window, operand 1']
    #allocation5 [shape = 's32[2]{0}', space=sflag, size = 0x8, scoped, tag = 'scoped memory for tpu_custom_call.1']
    #allocation6 [shape = 'u8[8192]{0}', space=vmem, size = 0x2000, scoped, tag = 'output window, operand 2']
    %10 = vsyncpa [#allocation3], 0
    %s11 = scalar_lea.sflag [#allocation3], 1
    %12 = vsyncpa %s11, 0
    %13 = vsyncpa [#allocation5], 0
    %s14 = scalar_lea.sflag [#allocation5], 1
    %15 = vsyncpa %s14, 0
    loop: start=0, step=1, limit=10
    $region2: #{tpu_custom_call.1} parent=1 // loop_pre_header
      _
    $region3: #{tpu_custom_call.1} parent=1 // loop_header
      %s17 = sphi 0, %s21
      %p18 = scmp.ge.s32.totalorder %s17, 10
      %s24 = sphi 0, %s43
      %s25 = sphi 0, %s39
      %s26 = sphi 0, %s35
      %s27 = sphi 0, %s24
      %s28 = sphi 0, %s25
      %s29 = sphi 0, %s26
      %s30 = sphi 0, %s27
      %s31 = sphi 0, %s28
      %s32 = sphi 0, %s29
      %s48 = sphi 0, %s50
      %s51 = sphi 0, %s48
      %s52 = sphi 0, %s51
      %s68 = sphi 0, %s52
      %s72 = sphi 0, %s72
      %s74 = sphi 0, %s72
      %s75 = sphi 0, %s74
      %s89 = sphi 0, %s75
      %s99 = sphi 0, %s101
      %s102 = sphi 0, %s99
      %s103 = sphi 0, %s102
      %s119 = sphi 0, %s103
      %s129 = sphi 0, %s131
      %s132 = sphi 0, %s129
      %s133 = sphi 0, %s132
      %s149 = sphi 0, %s133
      %s159 = sphi 0, %s161
      %s162 = sphi 0, %s159
      %s163 = sphi 0, %s162
      %s179 = sphi 0, %s163
    $region4: #{tpu_custom_call.1} parent=1 // loop_header_branch
      %20 = sbr.rel (%p18) target = $region8
    $region5: #{tpu_custom_call.1} parent=1 // loop_body
      %s22 = ssub.s32 %s17, 1
      %s23 = ssub.s32 %s17, 2
      %s33 = sadd.s32 1, %s26
      %p34 = scmp.ge.s32.totalorder %s33, 4
      %s35 = scalar_select %p34, 0, %s33
      %s36 = sadd.s32 1, %s25
      %s37 = scalar_select %p34, %s36, %s25
      %p38 = scmp.ge.s32.totalorder %s37, 1
      %s39 = scalar_select %p38, 0, %s37
      %s40 = sadd.s32 1, %s24
      %s41 = scalar_select %p38, %s40, %s24
      %p42 = scmp.ge.s32.totalorder %s41, 2
      %s43 = scalar_select %p42, 0, %s41
      %s44 = ssub.s32 %s24, %s43
      %s45 = ssub.s32 %s25, %s39
      %s46 = sor.u32 %s44, %s45
      %p47 = scmp.eq.s32.totalorder %s46, 0
      %s49 = sadd.s32 %s48, 1
      %s50 = scalar_select %p47, %s48, %s49
      %p53 = pneg %p47
      %p54 = scmp.eq.s32.totalorder %s17, 7
      %p55 = por %p53, %p54
      %p56 = scmp.ne.s32.totalorder %s48, %s51
      %p57 = scmp.eq.s32.totalorder %s17, 0
      %p58 = por %p56, %p57
      %p59 = scmp.ne.s32.totalorder %s48, %s51
      %p60 = scmp.eq.s32.totalorder %s22, 7
      %p61 = por %p59, %p60
      %p62 = scmp.ne.s32.totalorder %s51, %s52
      %p63 = scmp.eq.s32.totalorder %s22, 0
      %p64 = por %p62, %p63
      %p65 = scmp.ne.s32.totalorder %s51, %s52
      %p66 = scmp.eq.s32.totalorder %s23, 7
      %p67 = por %p65, %p66
      %p69 = scmp.ne.s32.totalorder %s52, %s68
      %p70 = scmp.eq.s32.totalorder %s23, 0
      %p71 = por %p69, %p70
      %s73 = sadd.s32 %s72, 1
      %p76 = scmp.eq.s32.totalorder %s17, 7
      %p77 = scmp.ne.s32.totalorder %s72, %s74
      %p78 = scmp.eq.s32.totalorder %s17, 0
      %p79 = por %p77, %p78
      %p80 = scmp.ne.s32.totalorder %s72, %s74
      %p81 = scmp.eq.s32.totalorder %s22, 7
      %p82 = por %p80, %p81
      %p83 = scmp.ne.s32.totalorder %s74, %s75
      %p84 = scmp.eq.s32.totalorder %s22, 0
      %p85 = por %p83, %p84
      %p86 = scmp.ne.s32.totalorder %s74, %s75
      %p87 = scmp.eq.s32.totalorder %s23, 7
      %p88 = por %p86, %p87
      %p90 = scmp.ne.s32.totalorder %s75, %s89
      %p91 = scmp.eq.s32.totalorder %s23, 0
      %p92 = por %p90, %p91
      %s93 = ssub.s32 %s24, %s43
      %s94 = ssub.s32 %s26, %s35
      %s95 = sor.u32 %s93, %s94
      %s96 = ssub.s32 %s25, %s39
      %s97 = sor.u32 %s95, %s96
      %p98 = scmp.eq.s32.totalorder %s97, 0
      %s100 = sadd.s32 %s99, 1
      %s101 = scalar_select %p98, %s99, %s100
      %p104 = pneg %p98
      %p105 = scmp.eq.s32.totalorder %s17, 7
      %p106 = por %p104, %p105
      %p107 = scmp.ne.s32.totalorder %s99, %s102
      %p108 = scmp.eq.s32.totalorder %s17, 0
      %p109 = por %p107, %p108
      %p110 = scmp.ne.s32.totalorder %s99, %s102
      %p111 = scmp.eq.s32.totalorder %s22, 7
      %p112 = por %p110, %p111
      %p113 = scmp.ne.s32.totalorder %s102, %s103
      %p114 = scmp.eq.s32.totalorder %s22, 0
      %p115 = por %p113, %p114
      %p116 = scmp.ne.s32.totalorder %s102, %s103
      %p117 = scmp.eq.s32.totalorder %s23, 7
      %p118 = por %p116, %p117
      %p120 = scmp.ne.s32.totalorder %s103, %s119
      %p121 = scmp.eq.s32.totalorder %s23, 0
      %p122 = por %p120, %p121
      %s123 = ssub.s32 %s24, %s43
      %s124 = ssub.s32 %s26, %s35
      %s125 = sor.u32 %s123, %s124
      %s126 = ssub.s32 %s25, %s39
      %s127 = sor.u32 %s125, %s126
      %p128 = scmp.eq.s32.totalorder %s127, 0
      %s130 = sadd.s32 %s129, 1
      %s131 = scalar_select %p128, %s129, %s130
      %p134 = pneg %p128
      %p135 = scmp.eq.s32.totalorder %s17, 7
      %p136 = por %p134, %p135
      %p137 = scmp.ne.s32.totalorder %s129, %s132
      %p138 = scmp.eq.s32.totalorder %s17, 0
      %p139 = por %p137, %p138
      %p140 = scmp.ne.s32.totalorder %s129, %s132
      %p141 = scmp.eq.s32.totalorder %s22, 7
      %p142 = por %p140, %p141
      %p143 = scmp.ne.s32.totalorder %s132, %s133
      %p144 = scmp.eq.s32.totalorder %s22, 0
      %p145 = por %p143, %p144
      %p146 = scmp.ne.s32.totalorder %s132, %s133
      %p147 = scmp.eq.s32.totalorder %s23, 7
      %p148 = por %p146, %p147
      %p150 = scmp.ne.s32.totalorder %s133, %s149
      %p151 = scmp.eq.s32.totalorder %s23, 0
      %p152 = por %p150, %p151
      %s153 = ssub.s32 %s24, %s43
      %s154 = ssub.s32 %s26, %s35
      %s155 = sor.u32 %s153, %s154
      %s156 = ssub.s32 %s25, %s39
      %s157 = sor.u32 %s155, %s156
      %p158 = scmp.eq.s32.totalorder %s157, 0
      %s160 = sadd.s32 %s159, 1
      %s161 = scalar_select %p158, %s159, %s160
      %p164 = pneg %p158
      %p165 = scmp.eq.s32.totalorder %s17, 7
      %p166 = por %p164, %p165
      %p167 = scmp.ne.s32.totalorder %s159, %s162
      %p168 = scmp.eq.s32.totalorder %s17, 0
      %p169 = por %p167, %p168
      %p170 = scmp.ne.s32.totalorder %s159, %s162
      %p171 = scmp.eq.s32.totalorder %s22, 7
      %p172 = por %p170, %p171
      %p173 = scmp.ne.s32.totalorder %s162, %s163
      %p174 = scmp.eq.s32.totalorder %s22, 0
      %p175 = por %p173, %p174
      %p176 = scmp.ne.s32.totalorder %s162, %s163
      %p177 = scmp.eq.s32.totalorder %s23, 7
      %p178 = por %p176, %p177
      %p180 = scmp.ne.s32.totalorder %s163, %s179
      %p181 = scmp.eq.s32.totalorder %s23, 0
      %p182 = por %p180, %p181
      %p183 = scmp.le.s32.totalorder 1, %s17
      %p184 = scmp.lt.s32.totalorder %s17, 9
      %p185 = pnand %p183, %p184
      %p186 = pneg %p185
      // Predicated region
      $region9: #{tpu_custom_call.1} parent=5 // pred_check
        _
      $region10: #{tpu_custom_call.1} parent=5 // pred_check_branch
        %188 = sbr.rel (%p185) target = $region12
      $region11: #{tpu_custom_call.1} parent=5 // pred_region
        %s189 = ssub.s32 %s17, 1
        // Predicated region
        $region13: #{tpu_custom_call.1} parent=11 // pred_check
          %p190 = pneg %p85
        $region14: #{tpu_custom_call.1} parent=11 // pred_check_branch
          %192 = sbr.rel (%p190) target = $region16
        $region15: #{tpu_custom_call.1} parent=11 // pred_region
          _
        $region16: #{tpu_custom_call.1} parent=11 // pred_fallthru
          _
      $region12: #{tpu_custom_call.1} parent=5 // pred_fallthru
        _
      %p193 = scmp.lt.s32.totalorder %s17, 8
      // Predicated region
      $region17: #{tpu_custom_call.1} parent=5 // pred_check
        %p194 = pneg %p193
      $region18: #{tpu_custom_call.1} parent=5 // pred_check_branch
        %196 = sbr.rel (%p194) target = $region20
      $region19: #{tpu_custom_call.1} parent=5 // pred_region
        // Predicated region
        $region21: #{tpu_custom_call.1} parent=19 // pred_check
          %p197 = pneg %p58
        $region22: #{tpu_custom_call.1} parent=19 // pred_check_branch
          %199 = sbr.rel (%p197) target = $region24
        $region23: #{tpu_custom_call.1} parent=19 // pred_region
          %p200 = scmp.lt.s32.totalorder %s24, 1
          %s201 = scalar_select %p200, %s24, 1
          %p202 = scmp.lt.s32.totalorder %s25, 0
          %s203 = scalar_select %p202, %s25, 0
          %s204 = sadd.s32 %s203, %s201
          %s205 = smul.addr %s204, 8
          %s206 = scalar_lea.vmem %s0, %s205
        $region24: #{tpu_custom_call.1} parent=19 // pred_fallthru
          _
      $region20: #{tpu_custom_call.1} parent=5 // pred_fallthru
        _
      %p207 = scmp.le.s32.totalorder 1, %s17
      %p208 = scmp.lt.s32.totalorder %s17, 9
      %p209 = pnand %p207, %p208
      %p210 = pneg %p209
      // Predicated region
      $region25: #{tpu_custom_call.1} parent=5 // pred_check
        _
      $region26: #{tpu_custom_call.1} parent=5 // pred_check_branch
        %212 = sbr.rel (%p209) target = $region28
      $region27: #{tpu_custom_call.1} parent=5 // pred_region
        %s213 = ssub.s32 %s17, 1
        %p214 = scmp.lt.s32.totalorder %s27, 1
        %s215 = scalar_select %p214, %s27, 1
        %p216 = scmp.lt.s32.totalorder %s28, 0
        %s217 = scalar_select %p216, %s28, 0
        %s218 = sadd.s32 %s217, %s215
        %s219 = smul.addr %s218, 8
        %s220 = scalar_lea.vmem %s0, %s219
        %p221 = pneg %p64
        %p222 = pneg %p61
        %p223 = pneg %p85
        %p224 = pneg %p82
        %p225 = pneg %p115
        %p226 = pneg %p112
        %s227 = sand.u32 %s102, 1
        %s228 = scalar_lea.sflag [#allocation3], %s227
        %s229 = sand.u32 %s102, 1
        %s230 = smul.addr %s229, 8
        %s231 = scalar_lea.vmem [#allocation2], %s230
        %p232 = pneg %p145
        %p233 = pneg %p142
        %s234 = sand.u32 %s22, 1
        %s235 = scalar_lea.sflag [#allocation5], %s234
        %s236 = sand.u32 %s132, 1
        %s237 = smul.addr %s236, 8
        %s238 = scalar_lea.vmem [#allocation4], %s237
        %p239 = pneg %p175
        %p240 = pneg %p172
        %s241 = sand.u32 %s22, 1
        %s242 = scalar_lea.sflag [#allocation5], %s241
        %s243 = sand.u32 %s162, 1
        %s244 = smul.addr %s243, 8
        %s245 = scalar_lea.vmem [#allocation6], %s244
        %p246 = scmp.lt.s32.totalorder %s27, 1
        %s247 = scalar_select %p246, %s27, 1
        %p248 = scmp.lt.s32.totalorder %s28, 0
        %s249 = scalar_select %p248, %s28, 0
        %s250 = sadd.s32 %s249, %s247
        %s251 = smul.addr %s250, 8
        %s252 = scalar_lea.vmem %s0, %s251
        %v253 = vld [vmem:[%s252] sm:$0xff]
        %s254 = smul.u32 %s29, 32
        %s255 = scalar_lea.vmem %s1, %s254
        %v256 = vld [vmem:[%s255] sm:$0xff]
        %v257 = vld [vmem:[%s255 + $0x8] sm:$0xff]
        %v258 = vld [vmem:[%s255 + $0x10] sm:$0xff]
        %v259 = vld [vmem:[%s255 + $0x18] sm:$0xff]
        %vm260 = vcmask 261120
        %v262 = vsel %vm260, %v253, 0
        %264 = vmatpush.msra.mxu0 0.0
        %265 = vmatpush.msra.mxu0 0.0
        %266 = vmatpush.msra.mxu0 0.0
        %267 = vmatpush.msra.mxu0 0.0
        %268 = vmatpush.msra.mxu0 0.0
        %269 = vmatpush.msra.mxu0 0.0
        %270 = vmatpush.msra.mxu0 0.0
        %271 = vmatpush.msra.mxu0 0.0
        %272 = vmatpush.msra.mxu0 0.0
        %273 = vmatpush.msra.mxu0 0.0
        %274 = vmatpush.msra.mxu0 0.0
        %275 = vmatpush.msra.mxu0 0.0
        %276 = vmatpush.msra.mxu0 %v259
        %277 = vmatpush.msra.mxu0 %v258
        %278 = vmatpush.msra.mxu0 %v257
        %279 = vmatpush.msra.mxu0 %v256
        %280 = vmatmul.f32.gmra.mxu0 %v262
        %v281 = vpop.f32.mrf.mxu0
        %v282 = vadd.f32 0.0, %v281
        %283 = vdwg.mxu0
        %vm284 = vcmask 64512
        %285 = vst.msk [vmem:[%s231] sm:$0xff] %vm284, %v282
        %287 = vrot.lane.b32.xlu0 %v282, 120
        %v288 = vpop.permute.xlu0 %287
        %290 = vst.msk [vmem:[%s238] sm:$0xff] %vm284, %v288
        %291 = vrot.lane.b32.xlu0 %v282, 112
        %v292 = vpop.permute.xlu0 %291
        %294 = vst.msk [vmem:[%s245] sm:$0xff] %vm284, %v292
        %s295 = sand.u32 %s102, 1
        %s296 = scalar_lea.sflag [#allocation3], %s295
        %s297 = sand.u32 %s102, 1
        %s298 = smul.addr %s297, 8
        %s299 = scalar_lea.vmem [#allocation2], %s298
        %s300 = sand.u32 %s22, 1
        %s301 = scalar_lea.sflag [#allocation5], %s300
        %s302 = sand.u32 %s132, 1
        %s303 = smul.addr %s302, 8
        %s304 = scalar_lea.vmem [#allocation4], %s303
        %s305 = sand.u32 %s22, 1
        %s306 = scalar_lea.sflag [#allocation5], %s305
        %s307 = sand.u32 %s162, 1
        %s308 = smul.addr %s307, 8
        %s309 = scalar_lea.vmem [#allocation6], %s308
        // Predicated region
        $region29: #{tpu_custom_call.1} parent=27 // pred_check
          %p310 = pneg %p112
        $region30: #{tpu_custom_call.1} parent=27 // pred_check_branch
          %312 = sbr.rel (%p310) target = $region32
        $region31: #{tpu_custom_call.1} parent=27 // pred_region
          %314 = vsyncadd %s296, 0
          %s315 = sadd.s32 %s28, %s29
          %s316 = smul.addr %s27, 4
          %s317 = sadd.s32 %s315, %s316
          %s318 = smul.addr %s317, 8
          %s319 = scalar_lea.hbm %s2, %s318
          %s321 = sshll.u32 %s299, 4
          %s322 = int_to_ptr.vmem [resolvable:$true] %s321
          %s323 = sshll.u32 %s319, 4
          %s324 = int_to_ptr.hbm [resolvable:$true] %s323
          %326 = dma.vmem_to_hbm [thread:$0]  %s322, 128, %s324, %s296
        $region32: #{tpu_custom_call.1} parent=27 // pred_fallthru
          _
        // Predicated region
        $region33: #{tpu_custom_call.1} parent=27 // pred_check
          %p327 = pneg %p142
        $region34: #{tpu_custom_call.1} parent=27 // pred_check_branch
          %329 = sbr.rel (%p327) target = $region36
        $region35: #{tpu_custom_call.1} parent=27 // pred_region
          %331 = vsyncadd %s301, 0
          %s332 = sadd.s32 %s28, %s29
          %s333 = smul.addr %s27, 4
          %s334 = sadd.s32 %s332, %s333
          %s335 = smul.addr %s334, 8
          %s336 = scalar_lea.hbm %s3, %s335
          %s338 = sshll.u32 %s304, 4
          %s339 = int_to_ptr.vmem [resolvable:$true] %s338
          %s340 = sshll.u32 %s336, 4
          %s341 = int_to_ptr.hbm [resolvable:$true] %s340
          %343 = dma.vmem_to_hbm [thread:$0]  %s339, 128, %s341, %s301
        $region36: #{tpu_custom_call.1} parent=27 // pred_fallthru
          _
        // Predicated region
        $region37: #{tpu_custom_call.1} parent=27 // pred_check
          %p344 = pneg %p172
        $region38: #{tpu_custom_call.1} parent=27 // pred_check_branch
          %346 = sbr.rel (%p344) target = $region40
        $region39: #{tpu_custom_call.1} parent=27 // pred_region
          %348 = vsyncadd %s306, 0
          %s349 = sadd.s32 %s28, %s29
          %s350 = smul.addr %s27, 4
          %s351 = sadd.s32 %s349, %s350
          %s352 = smul.addr %s351, 8
          %s353 = scalar_lea.hbm %s4, %s352
          %s355 = sshll.u32 %s309, 4
          %s356 = int_to_ptr.vmem [resolvable:$true] %s355
          %s357 = sshll.u32 %s353, 4
          %s358 = int_to_ptr.hbm [resolvable:$true] %s357
          %360 = dma.vmem_to_hbm [thread:$0]  %s356, 128, %s358, %s306
        $region40: #{tpu_custom_call.1} parent=27 // pred_fallthru
          _
      $region28: #{tpu_custom_call.1} parent=5 // pred_fallthru
        _
      %p361 = scmp.le.s32.totalorder 2, %s17
      // Predicated region
      $region41: #{tpu_custom_call.1} parent=5 // pred_check
        %p362 = pneg %p361
      $region42: #{tpu_custom_call.1} parent=5 // pred_check_branch
        %364 = sbr.rel (%p362) target = $region44
      $region43: #{tpu_custom_call.1} parent=5 // pred_region
        %s365 = ssub.s32 %s17, 2
        // Predicated region
        $region45: #{tpu_custom_call.1} parent=43 // pred_check
          %p366 = pneg %p118
        $region46: #{tpu_custom_call.1} parent=43 // pred_check_branch
          %368 = sbr.rel (%p366) target = $region48
        $region47: #{tpu_custom_call.1} parent=43 // pred_region
          %s369 = sand.u32 %s103, 1
          %s370 = scalar_lea.sflag [#allocation3], %s369
          %s371 = sand.u32 %s103, 1
          %s372 = smul.addr %s371, 8
          %s373 = scalar_lea.vmem [#allocation2], %s372
          %375 = dma.done %s370, 128
        $region48: #{tpu_custom_call.1} parent=43 // pred_fallthru
          _
        // Predicated region
        $region49: #{tpu_custom_call.1} parent=43 // pred_check
          %p376 = pneg %p148
        $region50: #{tpu_custom_call.1} parent=43 // pred_check_branch
          %378 = sbr.rel (%p376) target = $region52
        $region51: #{tpu_custom_call.1} parent=43 // pred_region
          %s379 = sand.u32 %s23, 1
          %s380 = scalar_lea.sflag [#allocation5], %s379
          %s381 = sand.u32 %s133, 1
          %s382 = smul.addr %s381, 8
          %s383 = scalar_lea.vmem [#allocation4], %s382
          %385 = dma.done %s380, 128
        $region52: #{tpu_custom_call.1} parent=43 // pred_fallthru
          _
        // Predicated region
        $region53: #{tpu_custom_call.1} parent=43 // pred_check
          %p386 = pneg %p178
        $region54: #{tpu_custom_call.1} parent=43 // pred_check_branch
          %388 = sbr.rel (%p386) target = $region56
        $region55: #{tpu_custom_call.1} parent=43 // pred_region
          %s389 = sand.u32 %s23, 1
          %s390 = scalar_lea.sflag [#allocation5], %s389
          %s391 = sand.u32 %s163, 1
          %s392 = smul.addr %s391, 8
          %s393 = scalar_lea.vmem [#allocation6], %s392
          %395 = dma.done %s390, 128
        $region56: #{tpu_custom_call.1} parent=43 // pred_fallthru
          _
      $region44: #{tpu_custom_call.1} parent=5 // pred_fallthru
        _
    $region6: #{tpu_custom_call.1} parent=1 // loop_footer
      %s21 = sadd.s32 1, %s17
    $region7: #{tpu_custom_call.1} parent=1 // loop_footer_branch
      %16 = sbr.rel target = $region3
    $region8: #{tpu_custom_call.1} parent=1 // loop_exit
      _
    %396 = vsyncpa [#allocation3], 1
    %s397 = scalar_lea.sflag [#allocation3], 1
    %398 = vsyncpa %s397, 1
    %399 = vsyncpa [#allocation5], 1
    %s400 = scalar_lea.sflag [#allocation5], 1
    %401 = vsyncpa %s400, 1

</llo_original>
